<compile_context>
chip_gen: v7x
topology: tpu7x:2x2x1
jax: 0.10.0
libtpu: 0.0.40
codegen_flags: <defaults>
</compile_context>

<pallas_src>
import functools

import jax
import jax.numpy as jnp
from jax.experimental import pallas as pl
from jax.experimental.pallas import tpu as pltpu


# ----------------------------------------------------------------------------
# Plain-JAX glue: Hermite spline (ported from h_poly / hspline_interpolate_1D)
# ----------------------------------------------------------------------------
def _h_poly(t):
    # t: (B, T) -> (B, 4, T)
    tt = t[..., None, :] ** jnp.arange(4, dtype=t.dtype).reshape(-1, 1)
    A = jnp.array(
        [[1, 0, -3, 2],
         [0, 1, -2, 1],
         [0, 0, 3, -2],
         [0, 0, -1, 1]], dtype=t.dtype)
    return jnp.einsum("ij,...jt->...it", A, tt)


def _hspline_interpolate_1d(x, y, xs):
    # x, y: (B, n) control points; xs: (B, T) query points
    m = (y[..., 1:] - y[..., :-1]) / (x[..., 1:] - x[..., :-1])
    m = jnp.concatenate(
        [m[..., :1], (m[..., 1:] + m[..., :-1]) / 2.0, m[..., -1:]], -1)
    idxs = jax.vmap(lambda a, v: jnp.searchsorted(a, v, side="left"))(
        x[..., 1:], xs)
    gx0 = jnp.take_along_axis(x, idxs, -1)
    gx1 = jnp.take_along_axis(x, idxs + 1, -1)
    dx = gx1 - gx0
    hh = _h_poly((xs - gx0) / dx)
    gy0 = jnp.take_along_axis(y, idxs, -1)
    gy1 = jnp.take_along_axis(y, idxs + 1, -1)
    gm0 = jnp.take_along_axis(m, idxs, -1)
    gm1 = jnp.take_along_axis(m, idxs + 1, -1)
    return (hh[..., 0, :] * gy0
            + hh[..., 1, :] * gm0 * dx
            + hh[..., 2, :] * gy1
            + hh[..., 3, :] * gm1 * dx)


def _mask_keep_batch(key, batch, size, max_width, num_masks):
    """[batch, size] float keep-mask (1 keep / 0 zero) for `num_masks` random spans."""
    keep = jnp.ones((batch, size), jnp.float32)
    idx = jnp.arange(size, dtype=jnp.int32)[None, :]
    for _ in range(num_masks):
        kw, kp, key = jax.random.split(key, 3)
        width = jnp.floor(jax.random.uniform(
            kw, (batch,), minval=0.0, maxval=float(max_width))).astype(jnp.int32)
        start = jax.random.randint(kp, (batch,), 0, size - width + 1)  # inclusive upper, as random.randint
        span = (idx >= start[:, None]) & (idx < (start + width)[:, None])
        keep = keep * jnp.where(span, 0.0, 1.0)
    return keep


def _pick_batch_block(B, cf, T, itemsize, cap_bytes=4 << 20, cap_bb=8):
    """Largest divisor of B (<= cap_bb) whose block stays under a VMEM budget."""
    best = 1
    for d in range(1, B + 1):
        if B % d == 0 and d <= cap_bb and d * cf * T * itemsize <= cap_bytes:
            best = d
    return best


# ----------------------------------------------------------------------------
# Pallas kernel: per-item time-warp (grid_sample, bilinear, align_corners=True,
# zeros padding) with frequency/time masks folded into the matmul operands.
# ----------------------------------------------------------------------------
def _specaug_kernel(src_ref, rowkeep_ref, tkeep_ref, spec_ref, out_ref):
    # src_ref    : VMEM f32 [Bb, 1, T]    per-item source pixel coordinates
    # rowkeep_ref: VMEM f32 [Bb, CF, 1]   frequency-mask keep, expanded over channels
    # tkeep_ref  : VMEM f32 [Bb, 1, T]    time-mask keep
    # spec_ref   : VMEM     [Bb, CF, T]
    # out_ref    : VMEM     [Bb, CF, T]
    Bb, CF, T = spec_ref.shape

    # Hoisted: shared row-index iota for the sparse warp construction.
    rows = jax.lax.broadcasted_iota(jnp.int32, (T, T), 0)

    # Bb is a small compile-time constant -> this loop is fully unrolled at
    # trace time with static indices (zero-cost slices).
    for bb in range(Bb):
        src = src_ref[bb, 0, :]                       # [T]
        i0f = jnp.floor(src)
        w1 = src - i0f                                # weight of right neighbor
        w0 = 1.0 - w1                                 # weight of left neighbor
        i0 = i0f.astype(jnp.int32)
        i1 = i0 + 1

        # Fold zeros-padding validity AND the time mask into the 1-D weights:
        # a zeroed destination column of `warp` zeroes that output frame.
        tkeep = tkeep_ref[bb, 0, :]                   # [T]
        w0 = w0 * jnp.where((i0 >= 0) & (i0 <= T - 1), tkeep, 0.0)
        w1 = w1 * jnp.where((i1 >= 0) & (i1 <= T - 1), tkeep, 0.0)

        # Sparse [T_src, T_dst] resampling matrix (two non-zeros per column).
        warp = (jnp.where(rows == i0[None, :], w0[None, :], 0.0)
                + jnp.where(rows == i1[None, :], w1[None, :], 0.0))

        # Fold the frequency mask into the LHS rows (zero rows stay zero).
        x = spec_ref[bb] * rowkeep_ref[bb]            # [CF, T] * [CF, 1]
        y = jnp.dot(x, warp, preferred_element_type=jnp.float32)   # MXU resample
        out_ref[bb] = y.astype(out_ref.dtype)


# ----------------------------------------------------------------------------
# Wrapper (parameter / RNG setup + pallas_call)
# ----------------------------------------------------------------------------
def spec_augment_pallas(spec, key, time_warping_para=8, frequency_masking_para=8,
                        time_masking_para=16, frequency_mask_num=1,
                        time_mask_num=1, per_sample_masks=False):
    assert spec.ndim == 4, "input spectra as [Batch, Channel, Frequency_dim, N_frame]"
    B, C, Fdim, Tdim = spec.shape
    W = int(time_warping_para)
    # Same constraint the PyTorch reference implicitly has via torch.randint.
    assert 0 < W and Tdim > 2 * W, "require 0 < W and T > 2*W"

    k_p, k_d, k_f, k_t = jax.random.split(key, 4)

    # --- time-warp parameters and warp curve (glue, tiny per-batch vectors) ---
    warp_p = jax.random.randint(k_p, (B,), W, Tdim - W)          # [W, T-W)
    warp_d = jax.random.randint(k_d, (B,), -W, W)                # [-W, W)
    xc = jnp.stack(
        [jnp.zeros((B,), jnp.float32),
         warp_p.astype(jnp.float32),
         jnp.full((B,), Tdim - 1.0, jnp.float32)], axis=1)
    yc = jnp.stack(
        [jnp.full((B,), -1.0, jnp.float32),
         (warp_p - warp_d).astype(jnp.float32) * 2.0 / (Tdim - 1.0) - 1.0,
         jnp.ones((B,), jnp.float32)], axis=1)
    xs = jnp.broadcast_to(
        jnp.linspace(0.0, Tdim - 1.0, Tdim, dtype=jnp.float32), (B, Tdim))
    ys = _hspline_interpolate_1d(xc, yc, xs)                     # normalized [-1, 1]
    # grid_sample(align_corners=True) un-normalization to pixel coordinates.
    src = ((ys + 1.0) * 0.5 * (Tdim - 1.0)).astype(jnp.float32).reshape(B, 1, Tdim)

    # --- mask keep-vectors (1-D, plain JAX; folded into operands in-kernel) ---
    if per_sample_masks:
        fk = _mask_keep_batch(k_f, B, Fdim, frequency_masking_para, frequency_mask_num)
        tk = _mask_keep_batch(k_t, B, Tdim, time_masking_para, time_mask_num)
    else:
        # Reference batch mode: one mask draw shared by the whole batch.
        fk = jnp.broadcast_to(
            _mask_keep_batch(k_f, 1, Fdim, frequency_masking_para, frequency_mask_num),
            (B, Fdim))
        tk = jnp.broadcast_to(
            _mask_keep_batch(k_t, 1, Tdim, time_masking_para, time_mask_num),
            (B, Tdim))
    CF = C * Fdim
    row_keep = jnp.broadcast_to(fk[:, None, :], (B, C, Fdim)).reshape(B, CF, 1)
    time_keep = tk.reshape(B, 1, Tdim)

    # Wrapper-side flatten: kernel sees lane-dense [Bb, C*F, T] blocks.
    spec2d = spec.reshape(B, CF, Tdim)

    Bb = _pick_batch_block(B, CF, Tdim, spec.dtype.itemsize)
    grid = (B // Bb,)

    grid_spec = pltpu.PrefetchScalarGridSpec(
        num_scalar_prefetch=0,
        grid=grid,
        in_specs=[
            pl.BlockSpec((Bb, 1, Tdim), lambda b: (b, 0, 0)),     # src coords
            pl.BlockSpec((Bb, CF, 1), lambda b: (b, 0, 0)),       # freq-mask keep
            pl.BlockSpec((Bb, 1, Tdim), lambda b: (b, 0, 0)),     # time-mask keep
            pl.BlockSpec((Bb, CF, Tdim), lambda b: (b, 0, 0)),    # spectrogram
        ],
        out_specs=pl.BlockSpec((Bb, CF, Tdim), lambda b: (b, 0, 0)),
    )
    out2d = pl.pallas_call(
        _specaug_kernel,
        out_shape=jax.ShapeDtypeStruct((B, CF, Tdim), spec.dtype),
        grid_spec=grid_spec,
        compiler_params=pltpu.CompilerParams(dimension_semantics=("parallel",)),
    )(src, row_keep, time_keep, spec2d)
    return out2d.reshape(B, C, Fdim, Tdim)


class SpecAugmentPallas:
    """Pallas equivalent of SpecAugmentTorch (self.p is unused, as in the reference)."""

    def __init__(self, W, F, mF, T, p, mT, batch):
        self.W, self.F, self.mF, self.T, self.p, self.mT = W, F, mF, T, p, mT
        self.batch = batch

    def __call__(self, spec_batch, key):
        # batch=False (per-sample masks) is now a single pallas_call as well,
        # instead of a Python loop of B separate launches.
        return spec_augment_pallas(
            spec_batch, key, self.W, self.F, self.T, self.mF, self.mT,
            per_sample_masks=not self.batch)


if __name__ == "__main__":
    key = jax.random.PRNGKey(0)
    k_in, k_aug = jax.random.split(key)
    B, C, Fdim, Tdim = 4, 1, 32, 128
    spec = jax.random.normal(k_in, (B, C, Fdim, Tdim), dtype=jnp.float32)

    # batch=True: shared frequency/time masks across the batch (reference behavior).
    module = SpecAugmentPallas(W=8, F=8, mF=1, T=16, p=1.0, mT=1, batch=True)
    out = jax.block_until_ready(module(spec, k_aug))
    assert out.shape == spec.shape and out.dtype == spec.dtype
    assert bool(jnp.all(jnp.isfinite(out)))

    # batch=False: per-sample masks, still one pallas_call.
    module_ns = SpecAugmentPallas(W=8, F=8, mF=1, T=16, p=1.0, mT=1, batch=False)
    out2 = jax.block_until_ready(module_ns(spec, k_aug))
    assert out2.shape == spec.shape and out2.dtype == spec.dtype
    assert bool(jnp.all(jnp.isfinite(out2)))

    print("KERNEL_OK")
</pallas_src>

<mosaic_0001>
module attributes {stable_mosaic.version = 11 : i64} {
  func.func @_specaug_kernel(%arg0: i32, %arg1: memref<4x1x128xf32, #tpu.memory_space<vmem>>, %arg2: memref<4x32x1xf32, #tpu.memory_space<vmem>>, %arg3: memref<4x1x128xf32, #tpu.memory_space<vmem>>, %arg4: memref<4x32x128xf32, #tpu.memory_space<vmem>>, %arg5: memref<4x32x128xf32, #tpu.memory_space<vmem>>) attributes {dimension_semantics = [#tpu.dimension_semantics<parallel>], iteration_bounds = array<i64: 1>, scalar_prefetch = 0 : i64, scratch_operands = 0 : i64, tpu.core_type = #tpu.core_type<tc>, window_params = [{transform_indices = @transform_0, window_bounds = array<i64: 4, 1, 128>}, {transform_indices = @transform_1, window_bounds = array<i64: 4, 32, 1>}, {transform_indices = @transform_2, window_bounds = array<i64: 4, 1, 128>}, {transform_indices = @transform_3, window_bounds = array<i64: 4, 32, 128>}, {transform_indices = @transform_4, window_bounds = array<i64: 4, 32, 128>}]} {
    %0 = tpu.iota {dimensions = array<i32: 0>} : vector<128x128xi32>
    %c0 = arith.constant 0 : index
    %c0_0 = arith.constant 0 : index
    %c0_1 = arith.constant 0 : index
    %1 = vector.load %arg1[%c0, %c0_0, %c0_1] : memref<4x1x128xf32, #tpu.memory_space<vmem>>, vector<1x1x128xf32>
    %2 = vector.shape_cast %1 : vector<1x1x128xf32> to vector<128xf32>
    %3 = math.floor %2 : vector<128xf32>
    %4 = arith.subf %2, %3 : vector<128xf32>
    %cst = arith.constant 1.000000e+00 : f32
    %5 = vector.broadcast %cst : f32 to vector<128xf32>
    %6 = arith.subf %5, %4 : vector<128xf32>
    %7 = arith.fptosi %3 : vector<128xf32> to vector<128xi32>
    %c1_i32 = arith.constant 1 : i32
    %8 = vector.broadcast %c1_i32 : i32 to vector<128xi32>
    %9 = arith.addi %7, %8 : vector<128xi32>
    %c0_2 = arith.constant 0 : index
    %c0_3 = arith.constant 0 : index
    %c0_4 = arith.constant 0 : index
    %10 = vector.load %arg3[%c0_2, %c0_3, %c0_4] : memref<4x1x128xf32, #tpu.memory_space<vmem>>, vector<1x1x128xf32>
    %11 = vector.shape_cast %10 : vector<1x1x128xf32> to vector<128xf32>
    %c0_i32 = arith.constant 0 : i32
    %12 = vector.broadcast %c0_i32 : i32 to vector<128xi32>
    %13 = arith.cmpi sge, %7, %12 : vector<128xi32>
    %c127_i32 = arith.constant 127 : i32
    %14 = vector.broadcast %c127_i32 : i32 to vector<128xi32>
    %15 = arith.cmpi sle, %7, %14 : vector<128xi32>
    %16 = arith.andi %13, %15 : vector<128xi1>
    %cst_5 = arith.constant 0.000000e+00 : f32
    %17 = vector.broadcast %cst_5 : f32 to vector<128xf32>
    %18 = arith.select %16, %11, %17 : vector<128xi1>, vector<128xf32>
    %19 = arith.mulf %6, %18 : vector<128xf32>
    %c0_i32_6 = arith.constant 0 : i32
    %20 = vector.broadcast %c0_i32_6 : i32 to vector<128xi32>
    %21 = arith.cmpi sge, %9, %20 : vector<128xi32>
    %c127_i32_7 = arith.constant 127 : i32
    %22 = vector.broadcast %c127_i32_7 : i32 to vector<128xi32>
    %23 = arith.cmpi sle, %9, %22 : vector<128xi32>
    %24 = arith.andi %21, %23 : vector<128xi1>
    %cst_8 = arith.constant 0.000000e+00 : f32
    %25 = vector.broadcast %cst_8 : f32 to vector<128xf32>
    %26 = arith.select %24, %11, %25 : vector<128xi1>, vector<128xf32>
    %27 = arith.mulf %4, %26 : vector<128xf32>
    %28 = vector.shape_cast %7 : vector<128xi32> to vector<1x128xi32>
    %29 = vector.broadcast %28 : vector<1x128xi32> to vector<128x128xi32>
    %30 = arith.cmpi eq, %0, %29 : vector<128x128xi32>
    %31 = vector.shape_cast %19 : vector<128xf32> to vector<1x128xf32>
    %cst_9 = arith.constant 0.000000e+00 : f32
    %32 = vector.shape_cast %31 : vector<1x128xf32> to vector<1x128xf32>
    %33 = vector.broadcast %32 : vector<1x128xf32> to vector<128x128xf32>
    %34 = vector.broadcast %cst_9 : f32 to vector<128x128xf32>
    %35 = arith.select %30, %33, %34 : vector<128x128xi1>, vector<128x128xf32>
    %36 = vector.shape_cast %9 : vector<128xi32> to vector<1x128xi32>
    %37 = vector.broadcast %36 : vector<1x128xi32> to vector<128x128xi32>
    %38 = arith.cmpi eq, %0, %37 : vector<128x128xi32>
    %39 = vector.shape_cast %27 : vector<128xf32> to vector<1x128xf32>
    %cst_10 = arith.constant 0.000000e+00 : f32
    %40 = vector.shape_cast %39 : vector<1x128xf32> to vector<1x128xf32>
    %41 = vector.broadcast %40 : vector<1x128xf32> to vector<128x128xf32>
    %42 = vector.broadcast %cst_10 : f32 to vector<128x128xf32>
    %43 = arith.select %38, %41, %42 : vector<128x128xi1>, vector<128x128xf32>
    %44 = arith.addf %35, %43 : vector<128x128xf32>
    %c0_11 = arith.constant 0 : index
    %c0_12 = arith.constant 0 : index
    %c0_13 = arith.constant 0 : index
    %45 = vector.load %arg4[%c0_11, %c0_12, %c0_13] : memref<4x32x128xf32, #tpu.memory_space<vmem>>, vector<1x32x128xf32>
    %46 = vector.shape_cast %45 : vector<1x32x128xf32> to vector<32x128xf32>
    %c0_14 = arith.constant 0 : index
    %c0_15 = arith.constant 0 : index
    %c0_16 = arith.constant 0 : index
    %47 = vector.load %arg2[%c0_14, %c0_15, %c0_16] : memref<4x32x1xf32, #tpu.memory_space<vmem>>, vector<1x32x1xf32>
    %48 = vector.shape_cast %47 : vector<1x32x1xf32> to vector<32x1xf32>
    %49 = vector.broadcast %48 : vector<32x1xf32> to vector<32x128xf32>
    %50 = arith.mulf %46, %49 : vector<32x128xf32>
    %cst_17 = arith.constant dense<0.000000e+00> : vector<32x128xf32>
    %51 = tpu.matmul %50, %44, %cst_17 {dimension_numbers = #tpu.dot_dimension_numbers<[1], [0], [0], [1], [0, 0, 1, 1], [], []>} : vector<32x128xf32>, vector<128x128xf32>, vector<32x128xf32> -> vector<32x128xf32>
    %c0_18 = arith.constant 0 : index
    %c0_19 = arith.constant 0 : index
    %c0_20 = arith.constant 0 : index
    %52 = vector.load %arg5[%c0_18, %c0_19, %c0_20] : memref<4x32x128xf32, #tpu.memory_space<vmem>>, vector<1x32x128xf32>
    %53 = vector.shape_cast %52 : vector<1x32x128xf32> to vector<32x128xf32>
    %54 = vector.shape_cast %51 : vector<32x128xf32> to vector<1x32x128xf32>
    tpu.vector_store %arg5[%c0_18, %c0_19, %c0_20], %54 {strides = array<i32>} : memref<4x32x128xf32, #tpu.memory_space<vmem>>, vector<1x32x128xf32>,
    %c1 = arith.constant 1 : index
    %c0_21 = arith.constant 0 : index
    %c0_22 = arith.constant 0 : index
    %55 = vector.load %arg1[%c1, %c0_21, %c0_22] : memref<4x1x128xf32, #tpu.memory_space<vmem>>, vector<1x1x128xf32>
    %56 = vector.shape_cast %55 : vector<1x1x128xf32> to vector<128xf32>
    %57 = math.floor %56 : vector<128xf32>
    %58 = arith.subf %56, %57 : vector<128xf32>
    %cst_23 = arith.constant 1.000000e+00 : f32
    %59 = vector.broadcast %cst_23 : f32 to vector<128xf32>
    %60 = arith.subf %59, %58 : vector<128xf32>
    %61 = arith.fptosi %57 : vector<128xf32> to vector<128xi32>
    %c1_i32_24 = arith.constant 1 : i32
    %62 = vector.broadcast %c1_i32_24 : i32 to vector<128xi32>
    %63 = arith.addi %61, %62 : vector<128xi32>
    %c1_25 = arith.constant 1 : index
    %c0_26 = arith.constant 0 : index
    %c0_27 = arith.constant 0 : index
    %64 = vector.load %arg3[%c1_25, %c0_26, %c0_27] : memref<4x1x128xf32, #tpu.memory_space<vmem>>, vector<1x1x128xf32>
    %65 = vector.shape_cast %64 : vector<1x1x128xf32> to vector<128xf32>
    %c0_i32_28 = arith.constant 0 : i32
    %66 = vector.broadcast %c0_i32_28 : i32 to vector<128xi32>
    %67 = arith.cmpi sge, %61, %66 : vector<128xi32>
    %c127_i32_29 = arith.constant 127 : i32
    %68 = vector.broadcast %c127_i32_29 : i32 to vector<128xi32>
    %69 = arith.cmpi sle, %61, %68 : vector<128xi32>
    %70 = arith.andi %67, %69 : vector<128xi1>
    %cst_30 = arith.constant 0.000000e+00 : f32
    %71 = vector.broadcast %cst_30 : f32 to vector<128xf32>
    %72 = arith.select %70, %65, %71 : vector<128xi1>, vector<128xf32>
    %73 = arith.mulf %60, %72 : vector<128xf32>
    %c0_i32_31 = arith.constant 0 : i32
    %74 = vector.broadcast %c0_i32_31 : i32 to vector<128xi32>
    %75 = arith.cmpi sge, %63, %74 : vector<128xi32>
    %c127_i32_32 = arith.constant 127 : i32
    %76 = vector.broadcast %c127_i32_32 : i32 to vector<128xi32>
    %77 = arith.cmpi sle, %63, %76 : vector<128xi32>
    %78 = arith.andi %75, %77 : vector<128xi1>
    %cst_33 = arith.constant 0.000000e+00 : f32
    %79 = vector.broadcast %cst_33 : f32 to vector<128xf32>
    %80 = arith.select %78, %65, %79 : vector<128xi1>, vector<128xf32>
    %81 = arith.mulf %58, %80 : vector<128xf32>
    %82 = vector.shape_cast %61 : vector<128xi32> to vector<1x128xi32>
    %83 = vector.broadcast %82 : vector<1x128xi32> to vector<128x128xi32>
    %84 = arith.cmpi eq, %0, %83 : vector<128x128xi32>
    %85 = vector.shape_cast %73 : vector<128xf32> to vector<1x128xf32>
    %cst_34 = arith.constant 0.000000e+00 : f32
    %86 = vector.shape_cast %85 : vector<1x128xf32> to vector<1x128xf32>
    %87 = vector.broadcast %86 : vector<1x128xf32> to vector<128x128xf32>
    %88 = vector.broadcast %cst_34 : f32 to vector<128x128xf32>
    %89 = arith.select %84, %87, %88 : vector<128x128xi1>, vector<128x128xf32>
    %90 = vector.shape_cast %63 : vector<128xi32> to vector<1x128xi32>
    %91 = vector.broadcast %90 : vector<1x128xi32> to vector<128x128xi32>
    %92 = arith.cmpi eq, %0, %91 : vector<128x128xi32>
    %93 = vector.shape_cast %81 : vector<128xf32> to vector<1x128xf32>
    %cst_35 = arith.constant 0.000000e+00 : f32
    %94 = vector.shape_cast %93 : vector<1x128xf32> to vector<1x128xf32>
    %95 = vector.broadcast %94 : vector<1x128xf32> to vector<128x128xf32>
    %96 = vector.broadcast %cst_35 : f32 to vector<128x128xf32>
    %97 = arith.select %92, %95, %96 : vector<128x128xi1>, vector<128x128xf32>
    %98 = arith.addf %89, %97 : vector<128x128xf32>
    %c1_36 = arith.constant 1 : index
    %c0_37 = arith.constant 0 : index
    %c0_38 = arith.constant 0 : index
    %99 = vector.load %arg4[%c1_36, %c0_37, %c0_38] : memref<4x32x128xf32, #tpu.memory_space<vmem>>, vector<1x32x128xf32>
    %100 = vector.shape_cast %99 : vector<1x32x128xf32> to vector<32x128xf32>
    %c1_39 = arith.constant 1 : index
    %c0_40 = arith.constant 0 : index
    %c0_41 = arith.constant 0 : index
    %101 = vector.load %arg2[%c1_39, %c0_40, %c0_41] : memref<4x32x1xf32, #tpu.memory_space<vmem>>, vector<1x32x1xf32>
    %102 = vector.shape_cast %101 : vector<1x32x1xf32> to vector<32x1xf32>
    %103 = vector.broadcast %102 : vector<32x1xf32> to vector<32x128xf32>
    %104 = arith.mulf %100, %103 : vector<32x128xf32>
    %cst_42 = arith.constant dense<0.000000e+00> : vector<32x128xf32>
    %105 = tpu.matmul %104, %98, %cst_42 {dimension_numbers = #tpu.dot_dimension_numbers<[1], [0], [0], [1], [0, 0, 1, 1], [], []>} : vector<32x128xf32>, vector<128x128xf32>, vector<32x128xf32> -> vector<32x128xf32>
    %c1_43 = arith.constant 1 : index
    %c0_44 = arith.constant 0 : index
    %c0_45 = arith.constant 0 : index
    %106 = vector.load %arg5[%c1_43, %c0_44, %c0_45] : memref<4x32x128xf32, #tpu.memory_space<vmem>>, vector<1x32x128xf32>
    %107 = vector.shape_cast %106 : vector<1x32x128xf32> to vector<32x128xf32>
    %108 = vector.shape_cast %105 : vector<32x128xf32> to vector<1x32x128xf32>
    tpu.vector_store %arg5[%c1_43, %c0_44, %c0_45], %108 {strides = array<i32>} : memref<4x32x128xf32, #tpu.memory_space<vmem>>, vector<1x32x128xf32>,
    %c2 = arith.constant 2 : index
    %c0_46 = arith.constant 0 : index
    %c0_47 = arith.constant 0 : index
    %109 = vector.load %arg1[%c2, %c0_46, %c0_47] : memref<4x1x128xf32, #tpu.memory_space<vmem>>, vector<1x1x128xf32>
    %110 = vector.shape_cast %109 : vector<1x1x128xf32> to vector<128xf32>
    %111 = math.floor %110 : vector<128xf32>
    %112 = arith.subf %110, %111 : vector<128xf32>
    %cst_48 = arith.constant 1.000000e+00 : f32
    %113 = vector.broadcast %cst_48 : f32 to vector<128xf32>
    %114 = arith.subf %113, %112 : vector<128xf32>
    %115 = arith.fptosi %111 : vector<128xf32> to vector<128xi32>
    %c1_i32_49 = arith.constant 1 : i32
    %116 = vector.broadcast %c1_i32_49 : i32 to vector<128xi32>
    %117 = arith.addi %115, %116 : vector<128xi32>
    %c2_50 = arith.constant 2 : index
    %c0_51 = arith.constant 0 : index
    %c0_52 = arith.constant 0 : index
    %118 = vector.load %arg3[%c2_50, %c0_51, %c0_52] : memref<4x1x128xf32, #tpu.memory_space<vmem>>, vector<1x1x128xf32>
    %119 = vector.shape_cast %118 : vector<1x1x128xf32> to vector<128xf32>
    %c0_i32_53 = arith.constant 0 : i32
    %120 = vector.broadcast %c0_i32_53 : i32 to vector<128xi32>
    %121 = arith.cmpi sge, %115, %120 : vector<128xi32>
    %c127_i32_54 = arith.constant 127 : i32
    %122 = vector.broadcast %c127_i32_54 : i32 to vector<128xi32>
    %123 = arith.cmpi sle, %115, %122 : vector<128xi32>
    %124 = arith.andi %121, %123 : vector<128xi1>
    %cst_55 = arith.constant 0.000000e+00 : f32
    %125 = vector.broadcast %cst_55 : f32 to vector<128xf32>
    %126 = arith.select %124, %119, %125 : vector<128xi1>, vector<128xf32>
    %127 = arith.mulf %114, %126 : vector<128xf32>
    %c0_i32_56 = arith.constant 0 : i32
    %128 = vector.broadcast %c0_i32_56 : i32 to vector<128xi32>
    %129 = arith.cmpi sge, %117, %128 : vector<128xi32>
    %c127_i32_57 = arith.constant 127 : i32
    %130 = vector.broadcast %c127_i32_57 : i32 to vector<128xi32>
    %131 = arith.cmpi sle, %117, %130 : vector<128xi32>
    %132 = arith.andi %129, %131 : vector<128xi1>
    %cst_58 = arith.constant 0.000000e+00 : f32
    %133 = vector.broadcast %cst_58 : f32 to vector<128xf32>
    %134 = arith.select %132, %119, %133 : vector<128xi1>, vector<128xf32>
    %135 = arith.mulf %112, %134 : vector<128xf32>
    %136 = vector.shape_cast %115 : vector<128xi32> to vector<1x128xi32>
    %137 = vector.broadcast %136 : vector<1x128xi32> to vector<128x128xi32>
    %138 = arith.cmpi eq, %0, %137 : vector<128x128xi32>
    %139 = vector.shape_cast %127 : vector<128xf32> to vector<1x128xf32>
    %cst_59 = arith.constant 0.000000e+00 : f32
    %140 = vector.shape_cast %139 : vector<1x128xf32> to vector<1x128xf32>
    %141 = vector.broadcast %140 : vector<1x128xf32> to vector<128x128xf32>
    %142 = vector.broadcast %cst_59 : f32 to vector<128x128xf32>
    %143 = arith.select %138, %141, %142 : vector<128x128xi1>, vector<128x128xf32>
    %144 = vector.shape_cast %117 : vector<128xi32> to vector<1x128xi32>
    %145 = vector.broadcast %144 : vector<1x128xi32> to vector<128x128xi32>
    %146 = arith.cmpi eq, %0, %145 : vector<128x128xi32>
    %147 = vector.shape_cast %135 : vector<128xf32> to vector<1x128xf32>
    %cst_60 = arith.constant 0.000000e+00 : f32
    %148 = vector.shape_cast %147 : vector<1x128xf32> to vector<1x128xf32>
    %149 = vector.broadcast %148 : vector<1x128xf32> to vector<128x128xf32>
    %150 = vector.broadcast %cst_60 : f32 to vector<128x128xf32>
    %151 = arith.select %146, %149, %150 : vector<128x128xi1>, vector<128x128xf32>
    %152 = arith.addf %143, %151 : vector<128x128xf32>
    %c2_61 = arith.constant 2 : index
    %c0_62 = arith.constant 0 : index
    %c0_63 = arith.constant 0 : index
    %153 = vector.load %arg4[%c2_61, %c0_62, %c0_63] : memref<4x32x128xf32, #tpu.memory_space<vmem>>, vector<1x32x128xf32>
    %154 = vector.shape_cast %153 : vector<1x32x128xf32> to vector<32x128xf32>
    %c2_64 = arith.constant 2 : index
    %c0_65 = arith.constant 0 : index
    %c0_66 = arith.constant 0 : index
    %155 = vector.load %arg2[%c2_64, %c0_65, %c0_66] : memref<4x32x1xf32, #tpu.memory_space<vmem>>, vector<1x32x1xf32>
    %156 = vector.shape_cast %155 : vector<1x32x1xf32> to vector<32x1xf32>
    %157 = vector.broadcast %156 : vector<32x1xf32> to vector<32x128xf32>
    %158 = arith.mulf %154, %157 : vector<32x128xf32>
    %cst_67 = arith.constant dense<0.000000e+00> : vector<32x128xf32>
    %159 = tpu.matmul %158, %152, %cst_67 {dimension_numbers = #tpu.dot_dimension_numbers<[1], [0], [0], [1], [0, 0, 1, 1], [], []>} : vector<32x128xf32>, vector<128x128xf32>, vector<32x128xf32> -> vector<32x128xf32>
    %c2_68 = arith.constant 2 : index
    %c0_69 = arith.constant 0 : index
    %c0_70 = arith.constant 0 : index
    %160 = vector.load %arg5[%c2_68, %c0_69, %c0_70] : memref<4x32x128xf32, #tpu.memory_space<vmem>>, vector<1x32x128xf32>
    %161 = vector.shape_cast %160 : vector<1x32x128xf32> to vector<32x128xf32>
    %162 = vector.shape_cast %159 : vector<32x128xf32> to vector<1x32x128xf32>
    tpu.vector_store %arg5[%c2_68, %c0_69, %c0_70], %162 {strides = array<i32>} : memref<4x32x128xf32, #tpu.memory_space<vmem>>, vector<1x32x128xf32>,
    %c3 = arith.constant 3 : index
    %c0_71 = arith.constant 0 : index
    %c0_72 = arith.constant 0 : index
    %163 = vector.load %arg1[%c3, %c0_71, %c0_72] : memref<4x1x128xf32, #tpu.memory_space<vmem>>, vector<1x1x128xf32>
    %164 = vector.shape_cast %163 : vector<1x1x128xf32> to vector<128xf32>
    %165 = math.floor %164 : vector<128xf32>
    %166 = arith.subf %164, %165 : vector<128xf32>
    %cst_73 = arith.constant 1.000000e+00 : f32
    %167 = vector.broadcast %cst_73 : f32 to vector<128xf32>
    %168 = arith.subf %167, %166 : vector<128xf32>
    %169 = arith.fptosi %165 : vector<128xf32> to vector<128xi32>
    %c1_i32_74 = arith.constant 1 : i32
    %170 = vector.broadcast %c1_i32_74 : i32 to vector<128xi32>
    %171 = arith.addi %169, %170 : vector<128xi32>
    %c3_75 = arith.constant 3 : index
    %c0_76 = arith.constant 0 : index
    %c0_77 = arith.constant 0 : index
    %172 = vector.load %arg3[%c3_75, %c0_76, %c0_77] : memref<4x1x128xf32, #tpu.memory_space<vmem>>, vector<1x1x128xf32>
    %173 = vector.shape_cast %172 : vector<1x1x128xf32> to vector<128xf32>
    %c0_i32_78 = arith.constant 0 : i32
    %174 = vector.broadcast %c0_i32_78 : i32 to vector<128xi32>
    %175 = arith.cmpi sge, %169, %174 : vector<128xi32>
    %c127_i32_79 = arith.constant 127 : i32
    %176 = vector.broadcast %c127_i32_79 : i32 to vector<128xi32>
    %177 = arith.cmpi sle, %169, %176 : vector<128xi32>
    %178 = arith.andi %175, %177 : vector<128xi1>
    %cst_80 = arith.constant 0.000000e+00 : f32
    %179 = vector.broadcast %cst_80 : f32 to vector<128xf32>
    %180 = arith.select %178, %173, %179 : vector<128xi1>, vector<128xf32>
    %181 = arith.mulf %168, %180 : vector<128xf32>
    %c0_i32_81 = arith.constant 0 : i32
    %182 = vector.broadcast %c0_i32_81 : i32 to vector<128xi32>
    %183 = arith.cmpi sge, %171, %182 : vector<128xi32>
    %c127_i32_82 = arith.constant 127 : i32
    %184 = vector.broadcast %c127_i32_82 : i32 to vector<128xi32>
    %185 = arith.cmpi sle, %171, %184 : vector<128xi32>
    %186 = arith.andi %183, %185 : vector<128xi1>
    %cst_83 = arith.constant 0.000000e+00 : f32
    %187 = vector.broadcast %cst_83 : f32 to vector<128xf32>
    %188 = arith.select %186, %173, %187 : vector<128xi1>, vector<128xf32>
    %189 = arith.mulf %166, %188 : vector<128xf32>
    %190 = vector.shape_cast %169 : vector<128xi32> to vector<1x128xi32>
    %191 = vector.broadcast %190 : vector<1x128xi32> to vector<128x128xi32>
    %192 = arith.cmpi eq, %0, %191 : vector<128x128xi32>
    %193 = vector.shape_cast %181 : vector<128xf32> to vector<1x128xf32>
    %cst_84 = arith.constant 0.000000e+00 : f32
    %194 = vector.shape_cast %193 : vector<1x128xf32> to vector<1x128xf32>
    %195 = vector.broadcast %194 : vector<1x128xf32> to vector<128x128xf32>
    %196 = vector.broadcast %cst_84 : f32 to vector<128x128xf32>
    %197 = arith.select %192, %195, %196 : vector<128x128xi1>, vector<128x128xf32>
    %198 = vector.shape_cast %171 : vector<128xi32> to vector<1x128xi32>
    %199 = vector.broadcast %198 : vector<1x128xi32> to vector<128x128xi32>
    %200 = arith.cmpi eq, %0, %199 : vector<128x128xi32>
    %201 = vector.shape_cast %189 : vector<128xf32> to vector<1x128xf32>
    %cst_85 = arith.constant 0.000000e+00 : f32
    %202 = vector.shape_cast %201 : vector<1x128xf32> to vector<1x128xf32>
    %203 = vector.broadcast %202 : vector<1x128xf32> to vector<128x128xf32>
    %204 = vector.broadcast %cst_85 : f32 to vector<128x128xf32>
    %205 = arith.select %200, %203, %204 : vector<128x128xi1>, vector<128x128xf32>
    %206 = arith.addf %197, %205 : vector<128x128xf32>
    %c3_86 = arith.constant 3 : index
    %c0_87 = arith.constant 0 : index
    %c0_88 = arith.constant 0 : index
    %207 = vector.load %arg4[%c3_86, %c0_87, %c0_88] : memref<4x32x128xf32, #tpu.memory_space<vmem>>, vector<1x32x128xf32>
    %208 = vector.shape_cast %207 : vector<1x32x128xf32> to vector<32x128xf32>
    %c3_89 = arith.constant 3 : index
    %c0_90 = arith.constant 0 : index
    %c0_91 = arith.constant 0 : index
    %209 = vector.load %arg2[%c3_89, %c0_90, %c0_91] : memref<4x32x1xf32, #tpu.memory_space<vmem>>, vector<1x32x1xf32>
    %210 = vector.shape_cast %209 : vector<1x32x1xf32> to vector<32x1xf32>
    %211 = vector.broadcast %210 : vector<32x1xf32> to vector<32x128xf32>
    %212 = arith.mulf %208, %211 : vector<32x128xf32>
    %cst_92 = arith.constant dense<0.000000e+00> : vector<32x128xf32>
    %213 = tpu.matmul %212, %206, %cst_92 {dimension_numbers = #tpu.dot_dimension_numbers<[1], [0], [0], [1], [0, 0, 1, 1], [], []>} : vector<32x128xf32>, vector<128x128xf32>, vector<32x128xf32> -> vector<32x128xf32>
    %c3_93 = arith.constant 3 : index
    %c0_94 = arith.constant 0 : index
    %c0_95 = arith.constant 0 : index
    %214 = vector.load %arg5[%c3_93, %c0_94, %c0_95] : memref<4x32x128xf32, #tpu.memory_space<vmem>>, vector<1x32x128xf32>
    %215 = vector.shape_cast %214 : vector<1x32x128xf32> to vector<32x128xf32>
    %216 = vector.shape_cast %213 : vector<32x128xf32> to vector<1x32x128xf32>
    tpu.vector_store %arg5[%c3_93, %c0_94, %c0_95], %216 {strides = array<i32>} : memref<4x32x128xf32, #tpu.memory_space<vmem>>, vector<1x32x128xf32>,
    return
  }
  func.func @transform_0(%arg0: i32) -> (i32, i32, i32) {
    %c0_i32 = arith.constant 0 : i32
    %c0_i32_0 = arith.constant 0 : i32
    %c0_i32_1 = arith.constant 0 : i32
    return %arg0, %c0_i32, %c0_i32_0 : i32, i32, i32
  }
  func.func @transform_1(%arg0: i32) -> (i32, i32, i32) {
    %c0_i32 = arith.constant 0 : i32
    %c0_i32_0 = arith.constant 0 : i32
    %c0_i32_1 = arith.constant 0 : i32
    return %arg0, %c0_i32, %c0_i32_0 : i32, i32, i32
  }
  func.func @transform_2(%arg0: i32) -> (i32, i32, i32) {
    %c0_i32 = arith.constant 0 : i32
    %c0_i32_0 = arith.constant 0 : i32
    %c0_i32_1 = arith.constant 0 : i32
    return %arg0, %c0_i32, %c0_i32_0 : i32, i32, i32
  }
  func.func @transform_3(%arg0: i32) -> (i32, i32, i32) {
    %c0_i32 = arith.constant 0 : i32
    %c0_i32_0 = arith.constant 0 : i32
    %c0_i32_1 = arith.constant 0 : i32
    return %arg0, %c0_i32, %c0_i32_0 : i32, i32, i32
  }
  func.func @transform_4(%arg0: i32) -> (i32, i32, i32) {
    %c0_i32 = arith.constant 0 : i32
    %c0_i32_0 = arith.constant 0 : i32
    %c0_i32_1 = arith.constant 0 : i32
    return %arg0, %c0_i32, %c0_i32_0 : i32, i32, i32
  }
}

</mosaic_0001>

<llo_original>
// kernel: tpu_custom_call.1
$region0: #{tpu_custom_call.1}
  #allocation0 [shape = 'u32[]', space=smem, size = 0x4, offset = 0x4, fixed_abs, tag = 'smem constant byte address 0x4 - core index']
  #allocation1 [shape = 'u32[144,128]{1,0:T(1,128)}', space=vmem, size = 0x12000, scoped, tag = 'internal scratch']
  %s0 = inlined_call_operand.vmem [shape: f32[4,1,128], index: 0, kind: input, shape index: {}]
  %s1 = inlined_call_operand.vmem [shape: f32[4,32,1], index: 1, kind: input, shape index: {}]
  %s2 = inlined_call_operand.vmem [shape: f32[4,1,128], index: 2, kind: input, shape index: {}]
  %s3 = inlined_call_operand.vmem [shape: f32[4,32,128], index: 3, kind: input, shape index: {}]
  %s4 = inlined_call_operand.hbm [shape: f32[4,32,128], index: 4, kind: output, shape index: {}]
  %s5 = sld [smem:[#allocation0]]
  $region26: #{tpu_custom_call.1} parent=0
    _
  %s7 = ssub.s32 1, %s5
  %s8 = scalar_select 0, %s7, %s5
  $region1: #{tpu_custom_call.1} parent=0
    #allocation2 [shape = 'u8[65536]{0}', space=vmem, size = 0x10000, scoped, tag = 'output window, operand 0, single buffered']
    #allocation3 [shape = 's32[1]{0}', space=sflag, size = 0x4, scoped, tag = 'scoped memory for tpu_custom_call.1']
    %9 = vsyncpa [#allocation3], 0
    // Predicated region
    $region2: #{tpu_custom_call.1} parent=1 // pred_check
      _
    $region3: #{tpu_custom_call.1} parent=1 // pred_check_branch
      %11 = sbr.rel (0) target = $region5
    $region4: #{tpu_custom_call.1} parent=1 // pred_region
      _
    $region5: #{tpu_custom_call.1} parent=1 // pred_fallthru
      _
    // Predicated region
    $region6: #{tpu_custom_call.1} parent=1 // pred_check
      _
    $region7: #{tpu_custom_call.1} parent=1 // pred_check_branch
      %13 = sbr.rel (0) target = $region9
    $region8: #{tpu_custom_call.1} parent=1 // pred_region
      _
    $region9: #{tpu_custom_call.1} parent=1 // pred_fallthru
      _
    // Predicated region
    $region10: #{tpu_custom_call.1} parent=1 // pred_check
      _
    $region11: #{tpu_custom_call.1} parent=1 // pred_check_branch
      %15 = sbr.rel (0) target = $region13
    $region12: #{tpu_custom_call.1} parent=1 // pred_region
      _
    $region13: #{tpu_custom_call.1} parent=1 // pred_fallthru
      _
    // Predicated region
    $region14: #{tpu_custom_call.1} parent=1 // pred_check
      _
    $region15: #{tpu_custom_call.1} parent=1 // pred_check_branch
      %17 = sbr.rel (0) target = $region17
    $region16: #{tpu_custom_call.1} parent=1 // pred_region
      _
    $region17: #{tpu_custom_call.1} parent=1 // pred_fallthru
      _
    %v18 = vlaneseq
    %v19 = vshrl.u32 %v18, 7
    %v20 = vadd.s32 %v19, 8
    %v21 = vadd.s32 %v19, 16
    %v22 = vadd.s32 %v19, 24
    %v23 = vadd.s32 %v19, 32
    %v24 = vadd.s32 %v19, 40
    %v25 = vadd.s32 %v19, 48
    %v26 = vadd.s32 %v19, 56
    %v27 = vadd.s32 %v19, 64
    %v28 = vadd.s32 %v19, 72
    %v29 = vadd.s32 %v19, 80
    %v30 = vadd.s32 %v19, 88
    %v31 = vadd.s32 %v19, 96
    %v32 = vadd.s32 %v19, 104
    %v33 = vadd.s32 %v19, 112
    %v34 = vadd.s32 %v19, 120
    %v35 = vld [vmem:[%s0] sm:$0x1]
    %v36 = vfloor.f32 %v35
    %v37 = vsub.f32 %v35, %v36
    %v38 = vsub.f32 1.0, %v37
    %v39 = vcvt.f32.s32.to.zero.pseudo %v36
    %v40 = vadd.s32 %v39, 1
    %v41 = vld [vmem:[%s2] sm:$0x1]
    %vm42 = vcmp.ge.s32.totalorder %v39, 0
    %vm43 = vcmp.le.s32.totalorder %v39, 127
    %vm44 = vmand %vm42, %vm43
    %v45 = vsel %vm44, %v41, 0.0
    %v46 = vmul.f32 %v38, %v45
    %vm47 = vcmp.ge.s32.totalorder %v40, 0
    %vm48 = vcmp.le.s32.totalorder %v40, 127
    %vm49 = vmand %vm47, %vm48
    %v50 = vsel %vm49, %v41, 0.0
    %v51 = vmul.f32 %v37, %v50
    %v52 = vlaneseq
    %v53 = vshrl.u32 %v52, 7
    %v54 = vsub.s32 0, %v53
    %v55 = vrot.slane %v39, %v54
    %vm56 = vcmp.eq.s32.totalorder %v19, %v55
    %vm57 = vcmp.eq.s32.totalorder %v20, %v55
    %vm58 = vcmp.eq.s32.totalorder %v21, %v55
    %vm59 = vcmp.eq.s32.totalorder %v22, %v55
    %vm60 = vcmp.eq.s32.totalorder %v23, %v55
    %vm61 = vcmp.eq.s32.totalorder %v24, %v55
    %vm62 = vcmp.eq.s32.totalorder %v25, %v55
    %vm63 = vcmp.eq.s32.totalorder %v26, %v55
    %vm64 = vcmp.eq.s32.totalorder %v27, %v55
    %vm65 = vcmp.eq.s32.totalorder %v28, %v55
    %vm66 = vcmp.eq.s32.totalorder %v29, %v55
    %vm67 = vcmp.eq.s32.totalorder %v30, %v55
    %vm68 = vcmp.eq.s32.totalorder %v31, %v55
    %vm69 = vcmp.eq.s32.totalorder %v32, %v55
    %vm70 = vcmp.eq.s32.totalorder %v33, %v55
    %vm71 = vcmp.eq.s32.totalorder %v34, %v55
    %v73 = vlaneseq
    %v74 = vshrl.u32 %v73, 7
    %v75 = vsub.s32 0, %v74
    %v76 = vrot.slane %v46, %v75
    %v78 = vsel %vm56, %v76, 0.0
    %v79 = vsel %vm57, %v76, 0.0
    %v80 = vsel %vm58, %v76, 0.0
    %v81 = vsel %vm59, %v76, 0.0
    %v82 = vsel %vm60, %v76, 0.0
    %v83 = vsel %vm61, %v76, 0.0
    %v84 = vsel %vm62, %v76, 0.0
    %v85 = vsel %vm63, %v76, 0.0
    %v86 = vsel %vm64, %v76, 0.0
    %v87 = vsel %vm65, %v76, 0.0
    %v88 = vsel %vm66, %v76, 0.0
    %v89 = vsel %vm67, %v76, 0.0
    %v90 = vsel %vm68, %v76, 0.0
    %v91 = vsel %vm69, %v76, 0.0
    %v92 = vsel %vm70, %v76, 0.0
    %v93 = vsel %vm71, %v76, 0.0
    %v94 = vlaneseq
    %v95 = vshrl.u32 %v94, 7
    %v96 = vsub.s32 0, %v95
    %v97 = vrot.slane %v40, %v96
    %vm98 = vcmp.eq.s32.totalorder %v19, %v97
    %vm99 = vcmp.eq.s32.totalorder %v20, %v97
    %vm100 = vcmp.eq.s32.totalorder %v21, %v97
    %vm101 = vcmp.eq.s32.totalorder %v22, %v97
    %vm102 = vcmp.eq.s32.totalorder %v23, %v97
    %vm103 = vcmp.eq.s32.totalorder %v24, %v97
    %vm104 = vcmp.eq.s32.totalorder %v25, %v97
    %vm105 = vcmp.eq.s32.totalorder %v26, %v97
    %vm106 = vcmp.eq.s32.totalorder %v27, %v97
    %vm107 = vcmp.eq.s32.totalorder %v28, %v97
    %vm108 = vcmp.eq.s32.totalorder %v29, %v97
    %vm109 = vcmp.eq.s32.totalorder %v30, %v97
    %vm110 = vcmp.eq.s32.totalorder %v31, %v97
    %vm111 = vcmp.eq.s32.totalorder %v32, %v97
    %vm112 = vcmp.eq.s32.totalorder %v33, %v97
    %vm113 = vcmp.eq.s32.totalorder %v34, %v97
    %v115 = vlaneseq
    %v116 = vshrl.u32 %v115, 7
    %v117 = vsub.s32 0, %v116
    %v118 = vrot.slane %v51, %v117
    %v120 = vsel %vm98, %v118, 0.0
    %v121 = vsel %vm99, %v118, 0.0
    %v122 = vsel %vm100, %v118, 0.0
    %v123 = vsel %vm101, %v118, 0.0
    %v124 = vsel %vm102, %v118, 0.0
    %v125 = vsel %vm103, %v118, 0.0
    %v126 = vsel %vm104, %v118, 0.0
    %v127 = vsel %vm105, %v118, 0.0
    %v128 = vsel %vm106, %v118, 0.0
    %v129 = vsel %vm107, %v118, 0.0
    %v130 = vsel %vm108, %v118, 0.0
    %v131 = vsel %vm109, %v118, 0.0
    %v132 = vsel %vm110, %v118, 0.0
    %v133 = vsel %vm111, %v118, 0.0
    %v134 = vsel %vm112, %v118, 0.0
    %v135 = vsel %vm113, %v118, 0.0
    %v136 = vadd.f32 %v78, %v120
    %v137 = vadd.f32 %v79, %v121
    %v138 = vadd.f32 %v80, %v122
    %v139 = vadd.f32 %v81, %v123
    %v140 = vadd.f32 %v82, %v124
    %v141 = vadd.f32 %v83, %v125
    %v142 = vadd.f32 %v84, %v126
    %v143 = vadd.f32 %v85, %v127
    %v144 = vadd.f32 %v86, %v128
    %v145 = vadd.f32 %v87, %v129
    %v146 = vadd.f32 %v88, %v130
    %v147 = vadd.f32 %v89, %v131
    %v148 = vadd.f32 %v90, %v132
    %v149 = vadd.f32 %v91, %v133
    %v150 = vadd.f32 %v92, %v134
    %v151 = vadd.f32 %v93, %v135
    %v152 = vld [vmem:[%s3] sm:$0xff]
    %v153 = vld [vmem:[%s3 + $0x8] sm:$0xff]
    %v154 = vld [vmem:[%s3 + $0x10] sm:$0xff]
    %v155 = vld [vmem:[%s3 + $0x18] sm:$0xff]
    %v156 = vld [vmem:[%s1] sm:$0xff]
    %v157 = vld [vmem:[%s1 + $0x8] sm:$0xff]
    %v158 = vld [vmem:[%s1 + $0x10] sm:$0xff]
    %v159 = vld [vmem:[%s1 + $0x18] sm:$0xff]
    %161 = vset.pattern.permute.xlu0 0
    %162 = vperm.xlu0 %161, %v156
    %v163 = vpop.permute.xlu0 %162
    %166 = vset.pattern.permute.xlu0 0
    %167 = vperm.xlu0 %166, %v157
    %v168 = vpop.permute.xlu0 %167
    %171 = vset.pattern.permute.xlu0 0
    %172 = vperm.xlu0 %171, %v158
    %v173 = vpop.permute.xlu0 %172
    %176 = vset.pattern.permute.xlu0 0
    %177 = vperm.xlu0 %176, %v159
    %v178 = vpop.permute.xlu0 %177
    %v180 = vmul.f32 %v152, %v163
    %v181 = vmul.f32 %v153, %v168
    %v182 = vmul.f32 %v154, %v173
    %v183 = vmul.f32 %v155, %v178
    %184 = vmatprep.subr.mxu0 0.0
    %185 = vmatpush1.msra.mxu0 %v136
    %186 = vmatprep.subr.mxu0 0.0
    %187 = vmatpush1.msra.mxu0 %v137
    %188 = vmatprep.subr.mxu0 0.0
    %189 = vmatpush1.msra.mxu0 %v138
    %190 = vmatprep.subr.mxu0 0.0
    %191 = vmatpush1.msra.mxu0 %v139
    %192 = vmatprep.subr.mxu0 0.0
    %193 = vmatpush1.msra.mxu0 %v140
    %194 = vmatprep.subr.mxu0 0.0
    %195 = vmatpush1.msra.mxu0 %v141
    %196 = vmatprep.subr.mxu0 0.0
    %197 = vmatpush1.msra.mxu0 %v142
    %198 = vmatprep.subr.mxu0 0.0
    %199 = vmatpush1.msra.mxu0 %v143
    %200 = vmatprep.subr.mxu0 0.0
    %201 = vmatpush1.msra.mxu0 %v144
    %202 = vmatprep.subr.mxu0 0.0
    %203 = vmatpush1.msra.mxu0 %v145
    %204 = vmatprep.subr.mxu0 0.0
    %205 = vmatpush1.msra.mxu0 %v146
    %206 = vmatprep.subr.mxu0 0.0
    %207 = vmatpush1.msra.mxu0 %v147
    %208 = vmatprep.subr.mxu0 0.0
    %209 = vmatpush1.msra.mxu0 %v148
    %210 = vmatprep.subr.mxu0 0.0
    %211 = vmatpush1.msra.mxu0 %v149
    %212 = vmatprep.subr.mxu0 0.0
    %213 = vmatpush1.msra.mxu0 %v150
    %214 = vmatprep.subr.mxu0 0.0
    %215 = vmatpush1.msra.mxu0 %v151
    %216 = vmatprep.subr.mxu0 0.0
    %217 = vmatpush1.msra.mxu0 0.0
    %218 = vmatprep.subr.mxu0 0.0
    %219 = vmatpush1.msra.mxu0 0.0
    %220 = vmatprep.subr.mxu0 0.0
    %221 = vmatpush1.msra.mxu0 0.0
    %222 = vmatprep.subr.mxu0 0.0
    %223 = vmatpush1.msra.mxu0 0.0
    %224 = vmatprep.subr.mxu0 0.0
    %225 = vmatpush1.msra.mxu0 0.0
    %226 = vmatprep.subr.mxu0 0.0
    %227 = vmatpush1.msra.mxu0 0.0
    %228 = vmatprep.subr.mxu0 0.0
    %229 = vmatpush1.msra.mxu0 0.0
    %230 = vmatprep.subr.mxu0 0.0
    %231 = vmatpush1.msra.mxu0 0.0
    %232 = vmatprep.subr.mxu0 0.0
    %233 = vmatpush1.msra.mxu0 0.0
    %234 = vmatprep.subr.mxu0 0.0
    %235 = vmatpush1.msra.mxu0 0.0
    %236 = vmatprep.subr.mxu0 0.0
    %237 = vmatpush1.msra.mxu0 0.0
    %238 = vmatprep.subr.mxu0 0.0
    %239 = vmatpush1.msra.mxu0 0.0
    %240 = vmatprep.subr.mxu0 0.0
    %241 = vmatpush1.msra.mxu0 0.0
    %242 = vmatprep.subr.mxu0 0.0
    %243 = vmatpush1.msra.mxu0 0.0
    %244 = vmatprep.subr.mxu0 0.0
    %245 = vmatpush1.msra.mxu0 0.0
    %246 = vmatprep.subr.mxu0 0.0
    %247 = vmatpush1.msra.mxu0 0.0
    %248 = vmatprep.mubr.f32.mxu0 0.0
    %249 = vmatmul.mubr.f32.gmra.mrb[0].mxu0 %v180
    %v250 = vpop.f32.mrb[0].mxu0
    %v251 = vadd.f32 0.0, %v250
    %v252 = vpop.f32.mrb[0].mxu0
    %253 = vmatprep.mubr.f32.mxu0 0.0
    %254 = vmatmul.mubr.f32.gmra.mrb[0].mxu0 %v181
    %v255 = vpop.f32.mrb[0].mxu0
    %v256 = vadd.f32 0.0, %v255
    %v257 = vpop.f32.mrb[0].mxu0
    %258 = vmatprep.mubr.f32.mxu0 0.0
    %259 = vmatmul.mubr.f32.gmra.mrb[0].mxu0 %v182
    %v260 = vpop.f32.mrb[0].mxu0
    %v261 = vadd.f32 0.0, %v260
    %v262 = vpop.f32.mrb[0].mxu0
    %263 = vmatprep.mubr.f32.mxu0 0.0
    %264 = vmatmul.mubr.f32.gmra.mrb[0].mxu0 %v183
    %v265 = vpop.f32.mrb[0].mxu0
    %v266 = vadd.f32 0.0, %v265
    %v267 = vpop.f32.mrb[0].mxu0
    %268 = vdwg.mxu0
    %269 = vst [vmem:[#allocation2] sm:$0xff] %v251
    %270 = vst [vmem:[#allocation2 + $0x8] sm:$0xff] %v256
    %271 = vst [vmem:[#allocation2 + $0x10] sm:$0xff] %v261
    %272 = vst [vmem:[#allocation2 + $0x18] sm:$0xff] %v266
    %s273 = scalar_lea.vmem %s0, 1
    %v274 = vld [vmem:[%s273] sm:$0x1]
    %v275 = vfloor.f32 %v274
    %v276 = vsub.f32 %v274, %v275
    %v277 = vsub.f32 1.0, %v276
    %v278 = vcvt.f32.s32.to.zero.pseudo %v275
    %v279 = vadd.s32 %v278, 1
    %s280 = scalar_lea.vmem %s2, 1
    %v281 = vld [vmem:[%s280] sm:$0x1]
    %vm282 = vcmp.ge.s32.totalorder %v278, 0
    %vm283 = vcmp.le.s32.totalorder %v278, 127
    %vm284 = vmand %vm282, %vm283
    %v285 = vsel %vm284, %v281, 0.0
    %v286 = vmul.f32 %v277, %v285
    %vm287 = vcmp.ge.s32.totalorder %v279, 0
    %vm288 = vcmp.le.s32.totalorder %v279, 127
    %vm289 = vmand %vm287, %vm288
    %v290 = vsel %vm289, %v281, 0.0
    %v291 = vmul.f32 %v276, %v290
    %v292 = vlaneseq
    %v293 = vshrl.u32 %v292, 7
    %v294 = vsub.s32 0, %v293
    %v295 = vrot.slane %v278, %v294
    %vm296 = vcmp.eq.s32.totalorder %v19, %v295
    %vm297 = vcmp.eq.s32.totalorder %v20, %v295
    %vm298 = vcmp.eq.s32.totalorder %v21, %v295
    %vm299 = vcmp.eq.s32.totalorder %v22, %v295
    %vm300 = vcmp.eq.s32.totalorder %v23, %v295
    %vm301 = vcmp.eq.s32.totalorder %v24, %v295
    %vm302 = vcmp.eq.s32.totalorder %v25, %v295
    %vm303 = vcmp.eq.s32.totalorder %v26, %v295
    %vm304 = vcmp.eq.s32.totalorder %v27, %v295
    %vm305 = vcmp.eq.s32.totalorder %v28, %v295
    %vm306 = vcmp.eq.s32.totalorder %v29, %v295
    %vm307 = vcmp.eq.s32.totalorder %v30, %v295
    %vm308 = vcmp.eq.s32.totalorder %v31, %v295
    %vm309 = vcmp.eq.s32.totalorder %v32, %v295
    %vm310 = vcmp.eq.s32.totalorder %v33, %v295
    %vm311 = vcmp.eq.s32.totalorder %v34, %v295
    %v313 = vlaneseq
    %v314 = vshrl.u32 %v313, 7
    %v315 = vsub.s32 0, %v314
    %v316 = vrot.slane %v286, %v315
    %v318 = vsel %vm296, %v316, 0.0
    %v319 = vsel %vm297, %v316, 0.0
    %v320 = vsel %vm298, %v316, 0.0
    %v321 = vsel %vm299, %v316, 0.0
    %v322 = vsel %vm300, %v316, 0.0
    %v323 = vsel %vm301, %v316, 0.0
    %v324 = vsel %vm302, %v316, 0.0
    %v325 = vsel %vm303, %v316, 0.0
    %v326 = vsel %vm304, %v316, 0.0
    %v327 = vsel %vm305, %v316, 0.0
    %v328 = vsel %vm306, %v316, 0.0
    %v329 = vsel %vm307, %v316, 0.0
    %v330 = vsel %vm308, %v316, 0.0
    %v331 = vsel %vm309, %v316, 0.0
    %v332 = vsel %vm310, %v316, 0.0
    %v333 = vsel %vm311, %v316, 0.0
    %v334 = vlaneseq
    %v335 = vshrl.u32 %v334, 7
    %v336 = vsub.s32 0, %v335
    %v337 = vrot.slane %v279, %v336
    %vm338 = vcmp.eq.s32.totalorder %v19, %v337
    %vm339 = vcmp.eq.s32.totalorder %v20, %v337
    %vm340 = vcmp.eq.s32.totalorder %v21, %v337
    %vm341 = vcmp.eq.s32.totalorder %v22, %v337
    %vm342 = vcmp.eq.s32.totalorder %v23, %v337
    %vm343 = vcmp.eq.s32.totalorder %v24, %v337
    %vm344 = vcmp.eq.s32.totalorder %v25, %v337
    %vm345 = vcmp.eq.s32.totalorder %v26, %v337
    %vm346 = vcmp.eq.s32.totalorder %v27, %v337
    %vm347 = vcmp.eq.s32.totalorder %v28, %v337
    %vm348 = vcmp.eq.s32.totalorder %v29, %v337
    %vm349 = vcmp.eq.s32.totalorder %v30, %v337
    %vm350 = vcmp.eq.s32.totalorder %v31, %v337
    %vm351 = vcmp.eq.s32.totalorder %v32, %v337
    %vm352 = vcmp.eq.s32.totalorder %v33, %v337
    %vm353 = vcmp.eq.s32.totalorder %v34, %v337
    %v355 = vlaneseq
    %v356 = vshrl.u32 %v355, 7
    %v357 = vsub.s32 0, %v356
    %v358 = vrot.slane %v291, %v357
    %v360 = vsel %vm338, %v358, 0.0
    %v361 = vsel %vm339, %v358, 0.0
    %v362 = vsel %vm340, %v358, 0.0
    %v363 = vsel %vm341, %v358, 0.0
    %v364 = vsel %vm342, %v358, 0.0
    %v365 = vsel %vm343, %v358, 0.0
    %v366 = vsel %vm344, %v358, 0.0
    %v367 = vsel %vm345, %v358, 0.0
    %v368 = vsel %vm346, %v358, 0.0
    %v369 = vsel %vm347, %v358, 0.0
    %v370 = vsel %vm348, %v358, 0.0
    %v371 = vsel %vm349, %v358, 0.0
    %v372 = vsel %vm350, %v358, 0.0
    %v373 = vsel %vm351, %v358, 0.0
    %v374 = vsel %vm352, %v358, 0.0
    %v375 = vsel %vm353, %v358, 0.0
    %v376 = vadd.f32 %v318, %v360
    %v377 = vadd.f32 %v319, %v361
    %v378 = vadd.f32 %v320, %v362
    %v379 = vadd.f32 %v321, %v363
    %v380 = vadd.f32 %v322, %v364
    %v381 = vadd.f32 %v323, %v365
    %v382 = vadd.f32 %v324, %v366
    %v383 = vadd.f32 %v325, %v367
    %v384 = vadd.f32 %v326, %v368
    %v385 = vadd.f32 %v327, %v369
    %v386 = vadd.f32 %v328, %v370
    %v387 = vadd.f32 %v329, %v371
    %v388 = vadd.f32 %v330, %v372
    %v389 = vadd.f32 %v331, %v373
    %v390 = vadd.f32 %v332, %v374
    %v391 = vadd.f32 %v333, %v375
    %s392 = scalar_lea.vmem %s3, 32
    %v393 = vld [vmem:[%s392] sm:$0xff]
    %v394 = vld [vmem:[%s392 + $0x8] sm:$0xff]
    %v395 = vld [vmem:[%s392 + $0x10] sm:$0xff]
    %v396 = vld [vmem:[%s392 + $0x18] sm:$0xff]
    %s397 = scalar_lea.vmem %s1, 32
    %v398 = vld [vmem:[%s397] sm:$0xff]
    %v399 = vld [vmem:[%s397 + $0x8] sm:$0xff]
    %v400 = vld [vmem:[%s397 + $0x10] sm:$0xff]
    %v401 = vld [vmem:[%s397 + $0x18] sm:$0xff]
    %403 = vset.pattern.permute.xlu0 0
    %404 = vperm.xlu0 %403, %v398
    %v405 = vpop.permute.xlu0 %404
    %408 = vset.pattern.permute.xlu0 0
    %409 = vperm.xlu0 %408, %v399
    %v410 = vpop.permute.xlu0 %409
    %413 = vset.pattern.permute.xlu0 0
    %414 = vperm.xlu0 %413, %v400
    %v415 = vpop.permute.xlu0 %414
    %418 = vset.pattern.permute.xlu0 0
    %419 = vperm.xlu0 %418, %v401
    %v420 = vpop.permute.xlu0 %419
    %v422 = vmul.f32 %v393, %v405
    %v423 = vmul.f32 %v394, %v410
    %v424 = vmul.f32 %v395, %v415
    %v425 = vmul.f32 %v396, %v420
    %426 = vmatprep.subr.mxu0 0.0
    %427 = vmatpush1.msra.mxu0 %v376
    %428 = vmatprep.subr.mxu0 0.0
    %429 = vmatpush1.msra.mxu0 %v377
    %430 = vmatprep.subr.mxu0 0.0
    %431 = vmatpush1.msra.mxu0 %v378
    %432 = vmatprep.subr.mxu0 0.0
    %433 = vmatpush1.msra.mxu0 %v379
    %434 = vmatprep.subr.mxu0 0.0
    %435 = vmatpush1.msra.mxu0 %v380
    %436 = vmatprep.subr.mxu0 0.0
    %437 = vmatpush1.msra.mxu0 %v381
    %438 = vmatprep.subr.mxu0 0.0
    %439 = vmatpush1.msra.mxu0 %v382
    %440 = vmatprep.subr.mxu0 0.0
    %441 = vmatpush1.msra.mxu0 %v383
    %442 = vmatprep.subr.mxu0 0.0
    %443 = vmatpush1.msra.mxu0 %v384
    %444 = vmatprep.subr.mxu0 0.0
    %445 = vmatpush1.msra.mxu0 %v385
    %446 = vmatprep.subr.mxu0 0.0
    %447 = vmatpush1.msra.mxu0 %v386
    %448 = vmatprep.subr.mxu0 0.0
    %449 = vmatpush1.msra.mxu0 %v387
    %450 = vmatprep.subr.mxu0 0.0
    %451 = vmatpush1.msra.mxu0 %v388
    %452 = vmatprep.subr.mxu0 0.0
    %453 = vmatpush1.msra.mxu0 %v389
    %454 = vmatprep.subr.mxu0 0.0
    %455 = vmatpush1.msra.mxu0 %v390
    %456 = vmatprep.subr.mxu0 0.0
    %457 = vmatpush1.msra.mxu0 %v391
    %458 = vmatprep.subr.mxu0 0.0
    %459 = vmatpush1.msra.mxu0 0.0
    %460 = vmatprep.subr.mxu0 0.0
    %461 = vmatpush1.msra.mxu0 0.0
    %462 = vmatprep.subr.mxu0 0.0
    %463 = vmatpush1.msra.mxu0 0.0
    %464 = vmatprep.subr.mxu0 0.0
    %465 = vmatpush1.msra.mxu0 0.0
    %466 = vmatprep.subr.mxu0 0.0
    %467 = vmatpush1.msra.mxu0 0.0
    %468 = vmatprep.subr.mxu0 0.0
    %469 = vmatpush1.msra.mxu0 0.0
    %470 = vmatprep.subr.mxu0 0.0
    %471 = vmatpush1.msra.mxu0 0.0
    %472 = vmatprep.subr.mxu0 0.0
    %473 = vmatpush1.msra.mxu0 0.0
    %474 = vmatprep.subr.mxu0 0.0
    %475 = vmatpush1.msra.mxu0 0.0
    %476 = vmatprep.subr.mxu0 0.0
    %477 = vmatpush1.msra.mxu0 0.0
    %478 = vmatprep.subr.mxu0 0.0
    %479 = vmatpush1.msra.mxu0 0.0
    %480 = vmatprep.subr.mxu0 0.0
    %481 = vmatpush1.msra.mxu0 0.0
    %482 = vmatprep.subr.mxu0 0.0
    %483 = vmatpush1.msra.mxu0 0.0
    %484 = vmatprep.subr.mxu0 0.0
    %485 = vmatpush1.msra.mxu0 0.0
    %486 = vmatprep.subr.mxu0 0.0
    %487 = vmatpush1.msra.mxu0 0.0
    %488 = vmatprep.subr.mxu0 0.0
    %489 = vmatpush1.msra.mxu0 0.0
    %490 = vmatprep.mubr.f32.mxu0 0.0
    %491 = vmatmul.mubr.f32.gmra.mrb[0].mxu0 %v422
    %v492 = vpop.f32.mrb[0].mxu0
    %v493 = vadd.f32 0.0, %v492
    %v494 = vpop.f32.mrb[0].mxu0
    %495 = vmatprep.mubr.f32.mxu0 0.0
    %496 = vmatmul.mubr.f32.gmra.mrb[0].mxu0 %v423
    %v497 = vpop.f32.mrb[0].mxu0
    %v498 = vadd.f32 0.0, %v497
    %v499 = vpop.f32.mrb[0].mxu0
    %500 = vmatprep.mubr.f32.mxu0 0.0
    %501 = vmatmul.mubr.f32.gmra.mrb[0].mxu0 %v424
    %v502 = vpop.f32.mrb[0].mxu0
    %v503 = vadd.f32 0.0, %v502
    %v504 = vpop.f32.mrb[0].mxu0
    %505 = vmatprep.mubr.f32.mxu0 0.0
    %506 = vmatmul.mubr.f32.gmra.mrb[0].mxu0 %v425
    %v507 = vpop.f32.mrb[0].mxu0
    %v508 = vadd.f32 0.0, %v507
    %v509 = vpop.f32.mrb[0].mxu0
    %510 = vdwg.mxu0
    %s511 = scalar_lea.vmem [#allocation2], 32
    %512 = vst [vmem:[%s511] sm:$0xff] %v493
    %513 = vst [vmem:[%s511 + $0x8] sm:$0xff] %v498
    %514 = vst [vmem:[%s511 + $0x10] sm:$0xff] %v503
    %515 = vst [vmem:[%s511 + $0x18] sm:$0xff] %v508
    %s516 = scalar_lea.vmem %s0, 2
    %v517 = vld [vmem:[%s516] sm:$0x1]
    %v518 = vfloor.f32 %v517
    %v519 = vsub.f32 %v517, %v518
    %v520 = vsub.f32 1.0, %v519
    %v521 = vcvt.f32.s32.to.zero.pseudo %v518
    %v522 = vadd.s32 %v521, 1
    %s523 = scalar_lea.vmem %s2, 2
    %v524 = vld [vmem:[%s523] sm:$0x1]
    %vm525 = vcmp.ge.s32.totalorder %v521, 0
    %vm526 = vcmp.le.s32.totalorder %v521, 127
    %vm527 = vmand %vm525, %vm526
    %v528 = vsel %vm527, %v524, 0.0
    %v529 = vmul.f32 %v520, %v528
    %vm530 = vcmp.ge.s32.totalorder %v522, 0
    %vm531 = vcmp.le.s32.totalorder %v522, 127
    %vm532 = vmand %vm530, %vm531
    %v533 = vsel %vm532, %v524, 0.0
    %v534 = vmul.f32 %v519, %v533
    %v535 = vlaneseq
    %v536 = vshrl.u32 %v535, 7
    %v537 = vsub.s32 0, %v536
    %v538 = vrot.slane %v521, %v537
    %vm539 = vcmp.eq.s32.totalorder %v19, %v538
    %vm540 = vcmp.eq.s32.totalorder %v20, %v538
    %vm541 = vcmp.eq.s32.totalorder %v21, %v538
    %vm542 = vcmp.eq.s32.totalorder %v22, %v538
    %vm543 = vcmp.eq.s32.totalorder %v23, %v538
    %vm544 = vcmp.eq.s32.totalorder %v24, %v538
    %vm545 = vcmp.eq.s32.totalorder %v25, %v538
    %vm546 = vcmp.eq.s32.totalorder %v26, %v538
    %vm547 = vcmp.eq.s32.totalorder %v27, %v538
    %vm548 = vcmp.eq.s32.totalorder %v28, %v538
    %vm549 = vcmp.eq.s32.totalorder %v29, %v538
    %vm550 = vcmp.eq.s32.totalorder %v30, %v538
    %vm551 = vcmp.eq.s32.totalorder %v31, %v538
    %vm552 = vcmp.eq.s32.totalorder %v32, %v538
    %vm553 = vcmp.eq.s32.totalorder %v33, %v538
    %vm554 = vcmp.eq.s32.totalorder %v34, %v538
    %v556 = vlaneseq
    %v557 = vshrl.u32 %v556, 7
    %v558 = vsub.s32 0, %v557
    %v559 = vrot.slane %v529, %v558
    %v561 = vsel %vm539, %v559, 0.0
    %v562 = vsel %vm540, %v559, 0.0
    %v563 = vsel %vm541, %v559, 0.0
    %v564 = vsel %vm542, %v559, 0.0
    %v565 = vsel %vm543, %v559, 0.0
    %v566 = vsel %vm544, %v559, 0.0
    %v567 = vsel %vm545, %v559, 0.0
    %v568 = vsel %vm546, %v559, 0.0
    %v569 = vsel %vm547, %v559, 0.0
    %v570 = vsel %vm548, %v559, 0.0
    %v571 = vsel %vm549, %v559, 0.0
    %v572 = vsel %vm550, %v559, 0.0
    %v573 = vsel %vm551, %v559, 0.0
    %v574 = vsel %vm552, %v559, 0.0
    %v575 = vsel %vm553, %v559, 0.0
    %v576 = vsel %vm554, %v559, 0.0
    %v577 = vlaneseq
    %v578 = vshrl.u32 %v577, 7
    %v579 = vsub.s32 0, %v578
    %v580 = vrot.slane %v522, %v579
    %vm581 = vcmp.eq.s32.totalorder %v19, %v580
    %vm582 = vcmp.eq.s32.totalorder %v20, %v580
    %vm583 = vcmp.eq.s32.totalorder %v21, %v580
    %vm584 = vcmp.eq.s32.totalorder %v22, %v580
    %vm585 = vcmp.eq.s32.totalorder %v23, %v580
    %vm586 = vcmp.eq.s32.totalorder %v24, %v580
    %vm587 = vcmp.eq.s32.totalorder %v25, %v580
    %vm588 = vcmp.eq.s32.totalorder %v26, %v580
    %vm589 = vcmp.eq.s32.totalorder %v27, %v580
    %vm590 = vcmp.eq.s32.totalorder %v28, %v580
    %vm591 = vcmp.eq.s32.totalorder %v29, %v580
    %vm592 = vcmp.eq.s32.totalorder %v30, %v580
    %vm593 = vcmp.eq.s32.totalorder %v31, %v580
    %vm594 = vcmp.eq.s32.totalorder %v32, %v580
    %vm595 = vcmp.eq.s32.totalorder %v33, %v580
    %vm596 = vcmp.eq.s32.totalorder %v34, %v580
    %v598 = vlaneseq
    %v599 = vshrl.u32 %v598, 7
    %v600 = vsub.s32 0, %v599
    %v601 = vrot.slane %v534, %v600
    %v603 = vsel %vm581, %v601, 0.0
    %v604 = vsel %vm582, %v601, 0.0
    %v605 = vsel %vm583, %v601, 0.0
    %v606 = vsel %vm584, %v601, 0.0
    %v607 = vsel %vm585, %v601, 0.0
    %v608 = vsel %vm586, %v601, 0.0
    %v609 = vsel %vm587, %v601, 0.0
    %v610 = vsel %vm588, %v601, 0.0
    %v611 = vsel %vm589, %v601, 0.0
    %v612 = vsel %vm590, %v601, 0.0
    %v613 = vsel %vm591, %v601, 0.0
    %v614 = vsel %vm592, %v601, 0.0
    %v615 = vsel %vm593, %v601, 0.0
    %v616 = vsel %vm594, %v601, 0.0
    %v617 = vsel %vm595, %v601, 0.0
    %v618 = vsel %vm596, %v601, 0.0
    %v619 = vadd.f32 %v561, %v603
    %v620 = vadd.f32 %v562, %v604
    %v621 = vadd.f32 %v563, %v605
    %v622 = vadd.f32 %v564, %v606
    %v623 = vadd.f32 %v565, %v607
    %v624 = vadd.f32 %v566, %v608
    %v625 = vadd.f32 %v567, %v609
    %v626 = vadd.f32 %v568, %v610
    %v627 = vadd.f32 %v569, %v611
    %v628 = vadd.f32 %v570, %v612
    %v629 = vadd.f32 %v571, %v613
    %v630 = vadd.f32 %v572, %v614
    %v631 = vadd.f32 %v573, %v615
    %v632 = vadd.f32 %v574, %v616
    %v633 = vadd.f32 %v575, %v617
    %v634 = vadd.f32 %v576, %v618
    %s635 = scalar_lea.vmem %s3, 64
    %v636 = vld [vmem:[%s635] sm:$0xff]
    %v637 = vld [vmem:[%s635 + $0x8] sm:$0xff]
    %v638 = vld [vmem:[%s635 + $0x10] sm:$0xff]
    %v639 = vld [vmem:[%s635 + $0x18] sm:$0xff]
    %s640 = scalar_lea.vmem %s1, 64
    %v641 = vld [vmem:[%s640] sm:$0xff]
    %v642 = vld [vmem:[%s640 + $0x8] sm:$0xff]
    %v643 = vld [vmem:[%s640 + $0x10] sm:$0xff]
    %v644 = vld [vmem:[%s640 + $0x18] sm:$0xff]
    %646 = vset.pattern.permute.xlu0 0
    %647 = vperm.xlu0 %646, %v641
    %v648 = vpop.permute.xlu0 %647
    %651 = vset.pattern.permute.xlu0 0
    %652 = vperm.xlu0 %651, %v642
    %v653 = vpop.permute.xlu0 %652
    %656 = vset.pattern.permute.xlu0 0
    %657 = vperm.xlu0 %656, %v643
    %v658 = vpop.permute.xlu0 %657
    %661 = vset.pattern.permute.xlu0 0
    %662 = vperm.xlu0 %661, %v644
    %v663 = vpop.permute.xlu0 %662
    %v665 = vmul.f32 %v636, %v648
    %v666 = vmul.f32 %v637, %v653
    %v667 = vmul.f32 %v638, %v658
    %v668 = vmul.f32 %v639, %v663
    %669 = vmatprep.subr.mxu0 0.0
    %670 = vmatpush1.msra.mxu0 %v619
    %671 = vmatprep.subr.mxu0 0.0
    %672 = vmatpush1.msra.mxu0 %v620
    %673 = vmatprep.subr.mxu0 0.0
    %674 = vmatpush1.msra.mxu0 %v621
    %675 = vmatprep.subr.mxu0 0.0
    %676 = vmatpush1.msra.mxu0 %v622
    %677 = vmatprep.subr.mxu0 0.0
    %678 = vmatpush1.msra.mxu0 %v623
    %679 = vmatprep.subr.mxu0 0.0
    %680 = vmatpush1.msra.mxu0 %v624
    %681 = vmatprep.subr.mxu0 0.0
    %682 = vmatpush1.msra.mxu0 %v625
    %683 = vmatprep.subr.mxu0 0.0
    %684 = vmatpush1.msra.mxu0 %v626
    %685 = vmatprep.subr.mxu0 0.0
    %686 = vmatpush1.msra.mxu0 %v627
    %687 = vmatprep.subr.mxu0 0.0
    %688 = vmatpush1.msra.mxu0 %v628
    %689 = vmatprep.subr.mxu0 0.0
    %690 = vmatpush1.msra.mxu0 %v629
    %691 = vmatprep.subr.mxu0 0.0
    %692 = vmatpush1.msra.mxu0 %v630
    %693 = vmatprep.subr.mxu0 0.0
    %694 = vmatpush1.msra.mxu0 %v631
    %695 = vmatprep.subr.mxu0 0.0
    %696 = vmatpush1.msra.mxu0 %v632
    %697 = vmatprep.subr.mxu0 0.0
    %698 = vmatpush1.msra.mxu0 %v633
    %699 = vmatprep.subr.mxu0 0.0
    %700 = vmatpush1.msra.mxu0 %v634
    %701 = vmatprep.subr.mxu0 0.0
    %702 = vmatpush1.msra.mxu0 0.0
    %703 = vmatprep.subr.mxu0 0.0
    %704 = vmatpush1.msra.mxu0 0.0
    %705 = vmatprep.subr.mxu0 0.0
    %706 = vmatpush1.msra.mxu0 0.0
    %707 = vmatprep.subr.mxu0 0.0
    %708 = vmatpush1.msra.mxu0 0.0
    %709 = vmatprep.subr.mxu0 0.0
    %710 = vmatpush1.msra.mxu0 0.0
    %711 = vmatprep.subr.mxu0 0.0
    %712 = vmatpush1.msra.mxu0 0.0
    %713 = vmatprep.subr.mxu0 0.0
    %714 = vmatpush1.msra.mxu0 0.0
    %715 = vmatprep.subr.mxu0 0.0
    %716 = vmatpush1.msra.mxu0 0.0
    %717 = vmatprep.subr.mxu0 0.0
    %718 = vmatpush1.msra.mxu0 0.0
    %719 = vmatprep.subr.mxu0 0.0
    %720 = vmatpush1.msra.mxu0 0.0
    %721 = vmatprep.subr.mxu0 0.0
    %722 = vmatpush1.msra.mxu0 0.0
    %723 = vmatprep.subr.mxu0 0.0
    %724 = vmatpush1.msra.mxu0 0.0
    %725 = vmatprep.subr.mxu0 0.0
    %726 = vmatpush1.msra.mxu0 0.0
    %727 = vmatprep.subr.mxu0 0.0
    %728 = vmatpush1.msra.mxu0 0.0
    %729 = vmatprep.subr.mxu0 0.0
    %730 = vmatpush1.msra.mxu0 0.0
    %731 = vmatprep.subr.mxu0 0.0
    %732 = vmatpush1.msra.mxu0 0.0
    %733 = vmatprep.mubr.f32.mxu0 0.0
    %734 = vmatmul.mubr.f32.gmra.mrb[0].mxu0 %v665
    %v735 = vpop.f32.mrb[0].mxu0
    %v736 = vadd.f32 0.0, %v735
    %v737 = vpop.f32.mrb[0].mxu0
    %738 = vmatprep.mubr.f32.mxu0 0.0
    %739 = vmatmul.mubr.f32.gmra.mrb[0].mxu0 %v666
    %v740 = vpop.f32.mrb[0].mxu0
    %v741 = vadd.f32 0.0, %v740
    %v742 = vpop.f32.mrb[0].mxu0
    %743 = vmatprep.mubr.f32.mxu0 0.0
    %744 = vmatmul.mubr.f32.gmra.mrb[0].mxu0 %v667
    %v745 = vpop.f32.mrb[0].mxu0
    %v746 = vadd.f32 0.0, %v745
    %v747 = vpop.f32.mrb[0].mxu0
    %748 = vmatprep.mubr.f32.mxu0 0.0
    %749 = vmatmul.mubr.f32.gmra.mrb[0].mxu0 %v668
    %v750 = vpop.f32.mrb[0].mxu0
    %v751 = vadd.f32 0.0, %v750
    %v752 = vpop.f32.mrb[0].mxu0
    %753 = vdwg.mxu0
    %s754 = scalar_lea.vmem [#allocation2], 64
    %755 = vst [vmem:[%s754] sm:$0xff] %v736
    %756 = vst [vmem:[%s754 + $0x8] sm:$0xff] %v741
    %757 = vst [vmem:[%s754 + $0x10] sm:$0xff] %v746
    %758 = vst [vmem:[%s754 + $0x18] sm:$0xff] %v751
    %s759 = scalar_lea.vmem %s0, 3
    %v760 = vld [vmem:[%s759] sm:$0x1]
    %v761 = vfloor.f32 %v760
    %v762 = vsub.f32 %v760, %v761
    %v763 = vsub.f32 1.0, %v762
    %v764 = vcvt.f32.s32.to.zero.pseudo %v761
    %v765 = vadd.s32 %v764, 1
    %s766 = scalar_lea.vmem %s2, 3
    %v767 = vld [vmem:[%s766] sm:$0x1]
    %vm768 = vcmp.ge.s32.totalorder %v764, 0
    %vm769 = vcmp.le.s32.totalorder %v764, 127
    %vm770 = vmand %vm768, %vm769
    %v771 = vsel %vm770, %v767, 0.0
    %v772 = vmul.f32 %v763, %v771
    %vm773 = vcmp.ge.s32.totalorder %v765, 0
    %vm774 = vcmp.le.s32.totalorder %v765, 127
    %vm775 = vmand %vm773, %vm774
    %v776 = vsel %vm775, %v767, 0.0
    %v777 = vmul.f32 %v762, %v776
    %v778 = vlaneseq
    %v779 = vshrl.u32 %v778, 7
    %v780 = vsub.s32 0, %v779
    %v781 = vrot.slane %v764, %v780
    %vm782 = vcmp.eq.s32.totalorder %v19, %v781
    %vm783 = vcmp.eq.s32.totalorder %v20, %v781
    %vm784 = vcmp.eq.s32.totalorder %v21, %v781
    %vm785 = vcmp.eq.s32.totalorder %v22, %v781
    %vm786 = vcmp.eq.s32.totalorder %v23, %v781
    %vm787 = vcmp.eq.s32.totalorder %v24, %v781
    %vm788 = vcmp.eq.s32.totalorder %v25, %v781
    %vm789 = vcmp.eq.s32.totalorder %v26, %v781
    %vm790 = vcmp.eq.s32.totalorder %v27, %v781
    %vm791 = vcmp.eq.s32.totalorder %v28, %v781
    %vm792 = vcmp.eq.s32.totalorder %v29, %v781
    %vm793 = vcmp.eq.s32.totalorder %v30, %v781
    %vm794 = vcmp.eq.s32.totalorder %v31, %v781
    %vm795 = vcmp.eq.s32.totalorder %v32, %v781
    %vm796 = vcmp.eq.s32.totalorder %v33, %v781
    %vm797 = vcmp.eq.s32.totalorder %v34, %v781
    %v799 = vlaneseq
    %v800 = vshrl.u32 %v799, 7
    %v801 = vsub.s32 0, %v800
    %v802 = vrot.slane %v772, %v801
    %v804 = vsel %vm782, %v802, 0.0
    %v805 = vsel %vm783, %v802, 0.0
    %v806 = vsel %vm784, %v802, 0.0
    %v807 = vsel %vm785, %v802, 0.0
    %v808 = vsel %vm786, %v802, 0.0
    %v809 = vsel %vm787, %v802, 0.0
    %v810 = vsel %vm788, %v802, 0.0
    %v811 = vsel %vm789, %v802, 0.0
    %v812 = vsel %vm790, %v802, 0.0
    %v813 = vsel %vm791, %v802, 0.0
    %v814 = vsel %vm792, %v802, 0.0
    %v815 = vsel %vm793, %v802, 0.0
    %v816 = vsel %vm794, %v802, 0.0
    %v817 = vsel %vm795, %v802, 0.0
    %v818 = vsel %vm796, %v802, 0.0
    %v819 = vsel %vm797, %v802, 0.0
    %v820 = vlaneseq
    %v821 = vshrl.u32 %v820, 7
    %v822 = vsub.s32 0, %v821
    %v823 = vrot.slane %v765, %v822
    %vm824 = vcmp.eq.s32.totalorder %v19, %v823
    %vm825 = vcmp.eq.s32.totalorder %v20, %v823
    %vm826 = vcmp.eq.s32.totalorder %v21, %v823
    %vm827 = vcmp.eq.s32.totalorder %v22, %v823
    %vm828 = vcmp.eq.s32.totalorder %v23, %v823
    %vm829 = vcmp.eq.s32.totalorder %v24, %v823
    %vm830 = vcmp.eq.s32.totalorder %v25, %v823
    %vm831 = vcmp.eq.s32.totalorder %v26, %v823
    %vm832 = vcmp.eq.s32.totalorder %v27, %v823
    %vm833 = vcmp.eq.s32.totalorder %v28, %v823
    %vm834 = vcmp.eq.s32.totalorder %v29, %v823
    %vm835 = vcmp.eq.s32.totalorder %v30, %v823
    %vm836 = vcmp.eq.s32.totalorder %v31, %v823
    %vm837 = vcmp.eq.s32.totalorder %v32, %v823
    %vm838 = vcmp.eq.s32.totalorder %v33, %v823
    %vm839 = vcmp.eq.s32.totalorder %v34, %v823
    %v841 = vlaneseq
    %v842 = vshrl.u32 %v841, 7
    %v843 = vsub.s32 0, %v842
    %v844 = vrot.slane %v777, %v843
    %v846 = vsel %vm824, %v844, 0.0
    %v847 = vsel %vm825, %v844, 0.0
    %v848 = vsel %vm826, %v844, 0.0
    %v849 = vsel %vm827, %v844, 0.0
    %v850 = vsel %vm828, %v844, 0.0
    %v851 = vsel %vm829, %v844, 0.0
    %v852 = vsel %vm830, %v844, 0.0
    %v853 = vsel %vm831, %v844, 0.0
    %v854 = vsel %vm832, %v844, 0.0
    %v855 = vsel %vm833, %v844, 0.0
    %v856 = vsel %vm834, %v844, 0.0
    %v857 = vsel %vm835, %v844, 0.0
    %v858 = vsel %vm836, %v844, 0.0
    %v859 = vsel %vm837, %v844, 0.0
    %v860 = vsel %vm838, %v844, 0.0
    %v861 = vsel %vm839, %v844, 0.0
    %v862 = vadd.f32 %v804, %v846
    %v863 = vadd.f32 %v805, %v847
    %v864 = vadd.f32 %v806, %v848
    %v865 = vadd.f32 %v807, %v849
    %v866 = vadd.f32 %v808, %v850
    %v867 = vadd.f32 %v809, %v851
    %v868 = vadd.f32 %v810, %v852
    %v869 = vadd.f32 %v811, %v853
    %v870 = vadd.f32 %v812, %v854
    %v871 = vadd.f32 %v813, %v855
    %v872 = vadd.f32 %v814, %v856
    %v873 = vadd.f32 %v815, %v857
    %v874 = vadd.f32 %v816, %v858
    %v875 = vadd.f32 %v817, %v859
    %v876 = vadd.f32 %v818, %v860
    %v877 = vadd.f32 %v819, %v861
    %s878 = scalar_lea.vmem %s3, 96
    %v879 = vld [vmem:[%s878] sm:$0xff]
    %v880 = vld [vmem:[%s878 + $0x8] sm:$0xff]
    %v881 = vld [vmem:[%s878 + $0x10] sm:$0xff]
    %v882 = vld [vmem:[%s878 + $0x18] sm:$0xff]
    %s883 = scalar_lea.vmem %s1, 96
    %v884 = vld [vmem:[%s883] sm:$0xff]
    %v885 = vld [vmem:[%s883 + $0x8] sm:$0xff]
    %v886 = vld [vmem:[%s883 + $0x10] sm:$0xff]
    %v887 = vld [vmem:[%s883 + $0x18] sm:$0xff]
    %889 = vset.pattern.permute.xlu0 0
    %890 = vperm.xlu0 %889, %v884
    %v891 = vpop.permute.xlu0 %890
    %894 = vset.pattern.permute.xlu0 0
    %895 = vperm.xlu0 %894, %v885
    %v896 = vpop.permute.xlu0 %895
    %899 = vset.pattern.permute.xlu0 0
    %900 = vperm.xlu0 %899, %v886
    %v901 = vpop.permute.xlu0 %900
    %904 = vset.pattern.permute.xlu0 0
    %905 = vperm.xlu0 %904, %v887
    %v906 = vpop.permute.xlu0 %905
    %v908 = vmul.f32 %v879, %v891
    %v909 = vmul.f32 %v880, %v896
    %v910 = vmul.f32 %v881, %v901
    %v911 = vmul.f32 %v882, %v906
    %912 = vmatprep.subr.mxu0 0.0
    %913 = vmatpush1.msra.mxu0 %v862
    %914 = vmatprep.subr.mxu0 0.0
    %915 = vmatpush1.msra.mxu0 %v863
    %916 = vmatprep.subr.mxu0 0.0
    %917 = vmatpush1.msra.mxu0 %v864
    %918 = vmatprep.subr.mxu0 0.0
    %919 = vmatpush1.msra.mxu0 %v865
    %920 = vmatprep.subr.mxu0 0.0
    %921 = vmatpush1.msra.mxu0 %v866
    %922 = vmatprep.subr.mxu0 0.0
    %923 = vmatpush1.msra.mxu0 %v867
    %924 = vmatprep.subr.mxu0 0.0
    %925 = vmatpush1.msra.mxu0 %v868
    %926 = vmatprep.subr.mxu0 0.0
    %927 = vmatpush1.msra.mxu0 %v869
    %928 = vmatprep.subr.mxu0 0.0
    %929 = vmatpush1.msra.mxu0 %v870
    %930 = vmatprep.subr.mxu0 0.0
    %931 = vmatpush1.msra.mxu0 %v871
    %932 = vmatprep.subr.mxu0 0.0
    %933 = vmatpush1.msra.mxu0 %v872
    %934 = vmatprep.subr.mxu0 0.0
    %935 = vmatpush1.msra.mxu0 %v873
    %936 = vmatprep.subr.mxu0 0.0
    %937 = vmatpush1.msra.mxu0 %v874
    %938 = vmatprep.subr.mxu0 0.0
    %939 = vmatpush1.msra.mxu0 %v875
    %940 = vmatprep.subr.mxu0 0.0
    %941 = vmatpush1.msra.mxu0 %v876
    %942 = vmatprep.subr.mxu0 0.0
    %943 = vmatpush1.msra.mxu0 %v877
    %944 = vmatprep.subr.mxu0 0.0
    %945 = vmatpush1.msra.mxu0 0.0
    %946 = vmatprep.subr.mxu0 0.0
    %947 = vmatpush1.msra.mxu0 0.0
    %948 = vmatprep.subr.mxu0 0.0
    %949 = vmatpush1.msra.mxu0 0.0
    %950 = vmatprep.subr.mxu0 0.0
    %951 = vmatpush1.msra.mxu0 0.0
    %952 = vmatprep.subr.mxu0 0.0
    %953 = vmatpush1.msra.mxu0 0.0
    %954 = vmatprep.subr.mxu0 0.0
    %955 = vmatpush1.msra.mxu0 0.0
    %956 = vmatprep.subr.mxu0 0.0
    %957 = vmatpush1.msra.mxu0 0.0
    %958 = vmatprep.subr.mxu0 0.0
    %959 = vmatpush1.msra.mxu0 0.0
    %960 = vmatprep.subr.mxu0 0.0
    %961 = vmatpush1.msra.mxu0 0.0
    %962 = vmatprep.subr.mxu0 0.0
    %963 = vmatpush1.msra.mxu0 0.0
    %964 = vmatprep.subr.mxu0 0.0
    %965 = vmatpush1.msra.mxu0 0.0
    %966 = vmatprep.subr.mxu0 0.0
    %967 = vmatpush1.msra.mxu0 0.0
    %968 = vmatprep.subr.mxu0 0.0
    %969 = vmatpush1.msra.mxu0 0.0
    %970 = vmatprep.subr.mxu0 0.0
    %971 = vmatpush1.msra.mxu0 0.0
    %972 = vmatprep.subr.mxu0 0.0
    %973 = vmatpush1.msra.mxu0 0.0
    %974 = vmatprep.subr.mxu0 0.0
    %975 = vmatpush1.msra.mxu0 0.0
    %976 = vmatprep.mubr.f32.mxu0 0.0
    %977 = vmatmul.mubr.f32.gmra.mrb[0].mxu0 %v908
    %v978 = vpop.f32.mrb[0].mxu0
    %v979 = vadd.f32 0.0, %v978
    %v980 = vpop.f32.mrb[0].mxu0
    %981 = vmatprep.mubr.f32.mxu0 0.0
    %982 = vmatmul.mubr.f32.gmra.mrb[0].mxu0 %v909
    %v983 = vpop.f32.mrb[0].mxu0
    %v984 = vadd.f32 0.0, %v983
    %v985 = vpop.f32.mrb[0].mxu0
    %986 = vmatprep.mubr.f32.mxu0 0.0
    %987 = vmatmul.mubr.f32.gmra.mrb[0].mxu0 %v910
    %v988 = vpop.f32.mrb[0].mxu0
    %v989 = vadd.f32 0.0, %v988
    %v990 = vpop.f32.mrb[0].mxu0
    %991 = vmatprep.mubr.f32.mxu0 0.0
    %992 = vmatmul.mubr.f32.gmra.mrb[0].mxu0 %v911
    %v993 = vpop.f32.mrb[0].mxu0
    %v994 = vadd.f32 0.0, %v993
    %v995 = vpop.f32.mrb[0].mxu0
    %996 = vdwg.mxu0
    %s997 = scalar_lea.vmem [#allocation2], 96
    %998 = vst [vmem:[%s997] sm:$0xff] %v979
    %999 = vst [vmem:[%s997 + $0x8] sm:$0xff] %v984
    %1000 = vst [vmem:[%s997 + $0x10] sm:$0xff] %v989
    %1001 = vst [vmem:[%s997 + $0x18] sm:$0xff] %v994
    // Predicated region
    $region18: #{tpu_custom_call.1} parent=1 // pred_check
      _
    $region19: #{tpu_custom_call.1} parent=1 // pred_check_branch
      %1003 = sbr.rel (0) target = $region21
    $region20: #{tpu_custom_call.1} parent=1 // pred_region
      %s1005 = ssub.s32 2048, 2048
      %1006 = vsyncadd [#allocation3], %s1005
      %s1007 = sshll.u32 [#allocation2], 4
      %s1008 = int_to_ptr.vmem [resolvable:$true] %s1007
      %1013 = dma.vmem_to_hbm [thread:$0]  %s1008, 2048, %s4, [#allocation3], 128, 128, 8
    $region21: #{tpu_custom_call.1} parent=1 // pred_fallthru
      _
    // Predicated region
    $region22: #{tpu_custom_call.1} parent=1 // pred_check
      _
    $region23: #{tpu_custom_call.1} parent=1 // pred_check_branch
      %1015 = sbr.rel (0) target = $region25
    $region24: #{tpu_custom_call.1} parent=1 // pred_region
      %1016 = dma.done [#allocation3], 2048
    $region25: #{tpu_custom_call.1} parent=1 // pred_fallthru
      _
    %1017 = vsyncpa [#allocation3], 1

</llo_original>
